<compile_context>
chip_gen: v7x
topology: tpu7x:2x2x1
jax: 0.10.0
libtpu: 0.0.40
codegen_flags: <defaults>
</compile_context>

<pallas_src>
import jax
import jax.numpy as jnp
from jax.experimental import pallas as pl
from jax.experimental.pallas import tpu as pltpu


_LANES = 512                       # lane-dense last dim (multiple of 128)
_TARGET_BLOCK_BYTES = 2 * 1024 * 1024  # ~2 MiB per input block
_NUM_CORE_SPLITS = 2               # shard across 2 TCs on v7x; harmless elsewhere


def _round_up(x, m):
    return ((x + m - 1) // m) * m


def _sdf_l1_kernel(x_ref, y_ref, o_ref):
    i = pl.program_id(1)

    @pl.when(i == 0)
    def _():
        o_ref[...] = jnp.zeros_like(o_ref)

    diff = x_ref[...].astype(jnp.float32) - y_ref[...].astype(jnp.float32)
    a = jnp.abs(diff)
    tm, lanes = a.shape
    # Fold rows into a vreg-shaped (8, lanes) partial sum: splitting the leading
    # (row) axis is layout-preserving, and the axis-0 reduce is pure VPU adds.
    o_ref[...] += jnp.sum(a.reshape(tm // 8, 8, lanes), axis=0)


def sdf_l1_loss(logits, sdf):
    """Pallas implementation of SDFL1Loss.forward(logits, sdf)."""
    assert logits.shape == sdf.shape
    assert logits.ndim >= 2
    *lead, _, _ = logits.shape
    n_lead = 1
    for d in lead:
        n_lead *= d
    scale = 1.0 / float(n_lead)  # mean over all leading (non-HW) dims

    N = logits.size
    L = _LANES
    itemsize = jnp.dtype(logits.dtype).itemsize

    # Rows of the lane-dense slab.
    R = pl.cdiv(N, L)

    # Row tile: multiple of 8, sized for ~_TARGET_BLOCK_BYTES per input block,
    # but no larger than one core-split's worth of rows.
    tm_target = max(8, _round_up(_TARGET_BLOCK_BYTES // (L * itemsize), 8))
    tm = max(8, min(tm_target, _round_up(pl.cdiv(R, _NUM_CORE_SPLITS), 8)))

    # Pad so the slab splits evenly into (_NUM_CORE_SPLITS * steps) row tiles.
    R_pad = _round_up(R, _NUM_CORE_SPLITS * tm)
    pad = R_pad * L - N

    x1 = logits.reshape(-1)
    y1 = sdf.reshape(-1)
    if pad:
        x1 = jnp.pad(x1, (0, pad))
        y1 = jnp.pad(y1, (0, pad))
    x2 = x1.reshape(R_pad, L)
    y2 = y1.reshape(R_pad, L)

    steps = R_pad // (_NUM_CORE_SPLITS * tm)

    def in_map(c, i):
        return (c * steps + i, 0)

    cost = pl.CostEstimate(
        flops=2 * N,
        transcendentals=0,
        bytes_accessed=2 * N * itemsize,
    )

    partials = pl.pallas_call(
        _sdf_l1_kernel,
        out_shape=jax.ShapeDtypeStruct((_NUM_CORE_SPLITS, 8, L), jnp.float32),
        grid_spec=pltpu.PrefetchScalarGridSpec(
            num_scalar_prefetch=0,
            grid=(_NUM_CORE_SPLITS, steps),
            in_specs=[
                pl.BlockSpec((tm, L), in_map),
                pl.BlockSpec((tm, L), in_map),
            ],
            out_specs=pl.BlockSpec((None, 8, L), lambda c, i: (c, 0, 0)),
        ),
        compiler_params=pltpu.CompilerParams(
            dimension_semantics=("parallel", "arbitrary"),
        ),
        cost_estimate=cost,
    )(x2, y2)

    # Tiny final reduction of the per-core vreg-shaped partials.
    return jnp.sum(partials) * scale


if __name__ == "__main__":
    key = jax.random.PRNGKey(0)
    k1, k2, k3, k4 = jax.random.split(key, 4)

    # Small NCHW case matching the module's typical usage.
    B, C, H, W = 2, 4, 16, 16
    logits = jax.random.normal(k1, (B, C, H, W), dtype=jnp.float32)
    sdf = jax.random.normal(k2, (B, C, H, W), dtype=jnp.float32)

    out = sdf_l1_loss(logits, sdf)
    out = jax.block_until_ready(out)

    ref = jnp.mean(jnp.sum(jnp.abs(logits - sdf), axis=(-1, -2)))
    assert jnp.allclose(out, ref, rtol=1e-5, atol=1e-5), (out, ref)

    # Odd, non-divisible shape to exercise the zero-padding path.
    a = jax.random.normal(k3, (3, 5, 7, 9), dtype=jnp.float32)
    b = jax.random.normal(k4, (3, 5, 7, 9), dtype=jnp.float32)
    out2 = jax.block_until_ready(sdf_l1_loss(a, b))
    ref2 = jnp.mean(jnp.sum(jnp.abs(a - b), axis=(-1, -2)))
    assert jnp.allclose(out2, ref2, rtol=1e-5, atol=1e-5), (out2, ref2)

    print("KERNEL_OK")
</pallas_src>

<mosaic_0001>
module attributes {stable_mosaic.version = 11 : i64} {
  func.func @_sdf_l1_kernel(%arg0: i32, %arg1: i32, %arg2: memref<8x512xf32, #tpu.memory_space<vmem>>, %arg3: memref<8x512xf32, #tpu.memory_space<vmem>>, %arg4: memref<1x8x512xf32, #tpu.memory_space<vmem>>) attributes {dimension_semantics = [#tpu.dimension_semantics<parallel>, #tpu.dimension_semantics<arbitrary>], iteration_bounds = array<i64: 2, 1>, scalar_prefetch = 0 : i64, scratch_operands = 0 : i64, tpu.core_type = #tpu.core_type<tc>, window_params = [{transform_indices = @transform_0, window_bounds = array<i64: 8, 512>}, {transform_indices = @transform_1, window_bounds = array<i64: 8, 512>}, {transform_indices = @transform_2, window_bounds = array<i64: 1, 8, 512>}]} {
    %c0_i32 = arith.constant 0 : i32
    %0 = arith.cmpi eq, %arg1, %c0_i32 : i32
    %1 = arith.extui %0 : i1 to i32
    %c0_i32_0 = arith.constant 0 : i32
    %2 = arith.cmpi ne, %1, %c0_i32_0 : i32
    scf.if %2 {
      %cst_10 = arith.constant 0.000000e+00 : f32
      %15 = vector.broadcast %cst_10 : f32 to vector<8x512xf32>
      %c0_11 = arith.constant 0 : index
      %c0_12 = arith.constant 0 : index
      %c0_13 = arith.constant 0 : index
      %16 = vector.load %arg4[%c0_11, %c0_12, %c0_13] : memref<1x8x512xf32, #tpu.memory_space<vmem>>, vector<1x8x512xf32>
      %17 = vector.shape_cast %16 : vector<1x8x512xf32> to vector<8x512xf32>
      %18 = vector.shape_cast %15 : vector<8x512xf32> to vector<1x8x512xf32>
      tpu.vector_store %arg4[%c0_11, %c0_12, %c0_13], %18 {strides = array<i32>} : memref<1x8x512xf32, #tpu.memory_space<vmem>>, vector<1x8x512xf32>,
    } else {
    }
    %c0 = arith.constant 0 : index
    %c0_1 = arith.constant 0 : index
    %3 = vector.load %arg2[%c0, %c0_1] : memref<8x512xf32, #tpu.memory_space<vmem>>, vector<8x512xf32>
    %c0_2 = arith.constant 0 : index
    %c0_3 = arith.constant 0 : index
    %4 = vector.load %arg3[%c0_2, %c0_3] : memref<8x512xf32, #tpu.memory_space<vmem>>, vector<8x512xf32>
    %5 = arith.subf %3, %4 : vector<8x512xf32>
    %6 = math.absf %5 : vector<8x512xf32>
    %c0_4 = arith.constant 0 : index
    %c0_5 = arith.constant 0 : index
    %c0_6 = arith.constant 0 : index
    %7 = vector.load %arg4[%c0_4, %c0_5, %c0_6] : memref<1x8x512xf32, #tpu.memory_space<vmem>>, vector<1x8x512xf32>
    %8 = vector.shape_cast %7 : vector<1x8x512xf32> to vector<8x512xf32>
    %9 = vector.shape_cast %6 : vector<8x512xf32> to vector<1x8x512xf32>
    %cst = arith.constant dense<0.000000e+00> : vector<8x512xf32>
    %10 = vector.multi_reduction <add>, %9, %cst [0] : vector<1x8x512xf32> to vector<8x512xf32>
    %11 = arith.addf %8, %10 : vector<8x512xf32>
    %c0_7 = arith.constant 0 : index
    %c0_8 = arith.constant 0 : index
    %c0_9 = arith.constant 0 : index
    %12 = vector.load %arg4[%c0_7, %c0_8, %c0_9] : memref<1x8x512xf32, #tpu.memory_space<vmem>>, vector<1x8x512xf32>
    %13 = vector.shape_cast %12 : vector<1x8x512xf32> to vector<8x512xf32>
    %14 = vector.shape_cast %11 : vector<8x512xf32> to vector<1x8x512xf32>
    tpu.vector_store %arg4[%c0_7, %c0_8, %c0_9], %14 {strides = array<i32>} : memref<1x8x512xf32, #tpu.memory_space<vmem>>, vector<1x8x512xf32>,
    return
  }
  func.func @transform_0(%arg0: i32, %arg1: i32) -> (i32, i32) {
    %c1_i32 = arith.constant 1 : i32
    %0 = arith.muli %arg0, %c1_i32 : i32
    %1 = arith.addi %0, %arg1 : i32
    %c0_i32 = arith.constant 0 : i32
    %c0_i32_0 = arith.constant 0 : i32
    return %1, %c0_i32 : i32, i32
  }
  func.func @transform_1(%arg0: i32, %arg1: i32) -> (i32, i32) {
    %c1_i32 = arith.constant 1 : i32
    %0 = arith.muli %arg0, %c1_i32 : i32
    %1 = arith.addi %0, %arg1 : i32
    %c0_i32 = arith.constant 0 : i32
    %c0_i32_0 = arith.constant 0 : i32
    return %1, %c0_i32 : i32, i32
  }
  func.func @transform_2(%arg0: i32, %arg1: i32) -> (i32, i32, i32) {
    %c0_i32 = arith.constant 0 : i32
    %c0_i32_0 = arith.constant 0 : i32
    %c0_i32_1 = arith.constant 0 : i32
    return %arg0, %c0_i32, %c0_i32_0 : i32, i32, i32
  }
}

</mosaic_0001>

<llo_original>
// kernel: tpu_custom_call.1
$region0: #{tpu_custom_call.1}
  #allocation0 [shape = 'u32[]', space=smem, size = 0x4, offset = 0x4, fixed_abs, tag = 'smem constant byte address 0x4 - core index']
  #allocation1 [shape = 'u32[144,128]{1,0:T(1,128)}', space=vmem, size = 0x12000, scoped, tag = 'internal scratch']
  %s0 = inlined_call_operand.hbm [shape: f32[16,512], index: 0, kind: input, shape index: {}]
  %s1 = inlined_call_operand.hbm [shape: f32[16,512], index: 1, kind: input, shape index: {}]
  %s2 = inlined_call_operand.hbm [shape: f32[2,8,512], index: 2, kind: output, shape index: {}]
  %s3 = sld [smem:[#allocation0]]
  $region53: #{tpu_custom_call.1} parent=0
    _
  %s5 = ssub.s32 1, %s3
  %s6 = scalar_select 0, %s5, %s3
  $region1: #{tpu_custom_call.1} parent=0
    #allocation2 [shape = 'u8[32768]{0}', space=vmem, size = 0x8000, scoped, tag = 'input window, operand 0']
    #allocation3 [shape = 's32[2]{0}', space=sflag, size = 0x8, scoped, tag = 'scoped memory for tpu_custom_call.1']
    #allocation4 [shape = 's32[2]{0}', space=sflag, size = 0x8, scoped, tag = 'scoped memory for tpu_custom_call.1']
    #allocation5 [shape = 'u8[32768]{0}', space=vmem, size = 0x8000, scoped, tag = 'input window, operand 1']
    #allocation6 [shape = 's32[2]{0}', space=sflag, size = 0x8, scoped, tag = 'scoped memory for tpu_custom_call.1']
    #allocation7 [shape = 'u8[32768]{0}', space=vmem, size = 0x8000, scoped, tag = 'output window, operand 0']
    %7 = vsyncpa [#allocation3], 0
    %s8 = scalar_lea.sflag [#allocation3], 1
    %9 = vsyncpa %s8, 0
    %10 = vsyncpa [#allocation6], 0
    %s11 = scalar_lea.sflag [#allocation6], 1
    %12 = vsyncpa %s11, 0
    %13 = vsyncpa [#allocation4], 0
    %s14 = scalar_lea.sflag [#allocation4], 1
    %15 = vsyncpa %s14, 0
    loop: start=0, step=1, limit=4
    $region2: #{tpu_custom_call.1} parent=1 // loop_pre_header
      _
    $region3: #{tpu_custom_call.1} parent=1 // loop_header
      %s17 = sphi 0, %s21
      %p18 = scmp.ge.s32.totalorder %s17, 4
      %s24 = sphi 0, %s36
      %s25 = sphi 0, %s32
      %s26 = sphi 0, %s24
      %s27 = sphi 0, %s25
      %s28 = sphi 0, %s26
      %s29 = sphi 0, %s27
      %s41 = sphi 0, %s43
      %s44 = sphi 0, %s41
      %s45 = sphi 0, %s44
      %s61 = sphi 0, %s45
      %s69 = sphi 0, %s71
      %s72 = sphi 0, %s69
      %s73 = sphi 0, %s72
      %s89 = sphi 0, %s73
      %s95 = sphi 0, %s97
      %s98 = sphi 0, %s95
      %s99 = sphi 0, %s98
      %s115 = sphi 0, %s99
    $region4: #{tpu_custom_call.1} parent=1 // loop_header_branch
      %20 = sbr.rel (%p18) target = $region8
    $region5: #{tpu_custom_call.1} parent=1 // loop_body
      %s22 = ssub.s32 %s17, 1
      %s23 = ssub.s32 %s17, 2
      %s30 = sadd.s32 1, %s25
      %p31 = scmp.ge.s32.totalorder %s30, 1
      %s32 = scalar_select %p31, 0, %s30
      %s33 = sadd.s32 1, %s24
      %s34 = scalar_select %p31, %s33, %s24
      %p35 = scmp.ge.s32.totalorder %s34, 2
      %s36 = scalar_select %p35, 0, %s34
      %s37 = sadd.s32 %s24, %s25
      %s38 = sadd.s32 %s36, %s32
      %s39 = ssub.s32 %s37, %s38
      %p40 = scmp.eq.s32.totalorder %s39, 0
      %s42 = sadd.s32 %s41, 1
      %s43 = scalar_select %p40, %s41, %s42
      %p46 = pneg %p40
      %p47 = scmp.eq.s32.totalorder %s17, 1
      %p48 = por %p46, %p47
      %p49 = scmp.ne.s32.totalorder %s41, %s44
      %p50 = scmp.eq.s32.totalorder %s17, 0
      %p51 = por %p49, %p50
      %p52 = scmp.ne.s32.totalorder %s41, %s44
      %p53 = scmp.eq.s32.totalorder %s22, 1
      %p54 = por %p52, %p53
      %p55 = scmp.ne.s32.totalorder %s44, %s45
      %p56 = scmp.eq.s32.totalorder %s22, 0
      %p57 = por %p55, %p56
      %p58 = scmp.ne.s32.totalorder %s44, %s45
      %p59 = scmp.eq.s32.totalorder %s23, 1
      %p60 = por %p58, %p59
      %p62 = scmp.ne.s32.totalorder %s45, %s61
      %p63 = scmp.eq.s32.totalorder %s23, 0
      %p64 = por %p62, %p63
      %s65 = sadd.s32 %s24, %s25
      %s66 = sadd.s32 %s36, %s32
      %s67 = ssub.s32 %s65, %s66
      %p68 = scmp.eq.s32.totalorder %s67, 0
      %s70 = sadd.s32 %s69, 1
      %s71 = scalar_select %p68, %s69, %s70
      %p74 = pneg %p68
      %p75 = scmp.eq.s32.totalorder %s17, 1
      %p76 = por %p74, %p75
      %p77 = scmp.ne.s32.totalorder %s69, %s72
      %p78 = scmp.eq.s32.totalorder %s17, 0
      %p79 = por %p77, %p78
      %p80 = scmp.ne.s32.totalorder %s69, %s72
      %p81 = scmp.eq.s32.totalorder %s22, 1
      %p82 = por %p80, %p81
      %p83 = scmp.ne.s32.totalorder %s72, %s73
      %p84 = scmp.eq.s32.totalorder %s22, 0
      %p85 = por %p83, %p84
      %p86 = scmp.ne.s32.totalorder %s72, %s73
      %p87 = scmp.eq.s32.totalorder %s23, 1
      %p88 = por %p86, %p87
      %p90 = scmp.ne.s32.totalorder %s73, %s89
      %p91 = scmp.eq.s32.totalorder %s23, 0
      %p92 = por %p90, %p91
      %s93 = ssub.s32 %s24, %s36
      %p94 = scmp.eq.s32.totalorder %s93, 0
      %s96 = sadd.s32 %s95, 1
      %s97 = scalar_select %p94, %s95, %s96
      %p100 = pneg %p94
      %p101 = scmp.eq.s32.totalorder %s17, 1
      %p102 = por %p100, %p101
      %p103 = scmp.ne.s32.totalorder %s95, %s98
      %p104 = scmp.eq.s32.totalorder %s17, 0
      %p105 = por %p103, %p104
      %p106 = scmp.ne.s32.totalorder %s95, %s98
      %p107 = scmp.eq.s32.totalorder %s22, 1
      %p108 = por %p106, %p107
      %p109 = scmp.ne.s32.totalorder %s98, %s99
      %p110 = scmp.eq.s32.totalorder %s22, 0
      %p111 = por %p109, %p110
      %p112 = scmp.ne.s32.totalorder %s98, %s99
      %p113 = scmp.eq.s32.totalorder %s23, 1
      %p114 = por %p112, %p113
      %p116 = scmp.ne.s32.totalorder %s99, %s115
      %p117 = scmp.eq.s32.totalorder %s23, 0
      %p118 = por %p116, %p117
      %p119 = scmp.le.s32.totalorder 1, %s17
      %p120 = scmp.lt.s32.totalorder %s17, 3
      %p121 = pnand %p119, %p120
      %p122 = pneg %p121
      // Predicated region
      $region9: #{tpu_custom_call.1} parent=5 // pred_check
        _
      $region10: #{tpu_custom_call.1} parent=5 // pred_check_branch
        %124 = sbr.rel (%p121) target = $region12
      $region11: #{tpu_custom_call.1} parent=5 // pred_region
        %s125 = ssub.s32 %s17, 1
      $region12: #{tpu_custom_call.1} parent=5 // pred_fallthru
        _
      %p126 = scmp.lt.s32.totalorder %s17, 2
      // Predicated region
      $region13: #{tpu_custom_call.1} parent=5 // pred_check
        %p127 = pneg %p126
      $region14: #{tpu_custom_call.1} parent=5 // pred_check_branch
        %129 = sbr.rel (%p127) target = $region16
      $region15: #{tpu_custom_call.1} parent=5 // pred_region
        // Predicated region
        $region17: #{tpu_custom_call.1} parent=15 // pred_check
          %p130 = pneg %p51
        $region18: #{tpu_custom_call.1} parent=15 // pred_check_branch
          %132 = sbr.rel (%p130) target = $region20
        $region19: #{tpu_custom_call.1} parent=15 // pred_region
          %s133 = sand.u32 %s41, 1
          %s134 = scalar_lea.sflag [#allocation3], %s133
          %s135 = sand.u32 %s41, 1
          %s136 = smul.addr %s135, 32
          %s137 = scalar_lea.vmem [#allocation2], %s136
          %s138 = sadd.s32 %s24, %s25
          %s140 = ssub.s32 512, 512
          %141 = vsyncadd %s134, %s140
          %s142 = smul.addr %s138, 4
          %s143 = smul.addr %s142, 128
          %s144 = scalar_lea.hbm %s0, %s143
          %s146 = sshll.u32 %s137, 4
          %s147 = int_to_ptr.vmem [resolvable:$true] %s146
          %149 = dma.hbm_to_vmem [thread:$0]  %s144, 512, %s147, %s134
        $region20: #{tpu_custom_call.1} parent=15 // pred_fallthru
          _
        // Predicated region
        $region21: #{tpu_custom_call.1} parent=15 // pred_check
          %p150 = pneg %p79
        $region22: #{tpu_custom_call.1} parent=15 // pred_check_branch
          %152 = sbr.rel (%p150) target = $region24
        $region23: #{tpu_custom_call.1} parent=15 // pred_region
          %s153 = sand.u32 %s69, 1
          %s154 = scalar_lea.sflag [#allocation6], %s153
          %s155 = sand.u32 %s69, 1
          %s156 = smul.addr %s155, 32
          %s157 = scalar_lea.vmem [#allocation5], %s156
          %s158 = sadd.s32 %s24, %s25
          %s160 = ssub.s32 512, 512
          %161 = vsyncadd %s154, %s160
          %s162 = smul.addr %s158, 4
          %s163 = smul.addr %s162, 128
          %s164 = scalar_lea.hbm %s1, %s163
          %s166 = sshll.u32 %s157, 4
          %s167 = int_to_ptr.vmem [resolvable:$true] %s166
          %169 = dma.hbm_to_vmem [thread:$0]  %s164, 512, %s167, %s154
        $region24: #{tpu_custom_call.1} parent=15 // pred_fallthru
          _
      $region16: #{tpu_custom_call.1} parent=5 // pred_fallthru
        _
      %p170 = scmp.le.s32.totalorder 1, %s17
      %p171 = scmp.lt.s32.totalorder %s17, 3
      %p172 = pnand %p170, %p171
      %p173 = pneg %p172
      // Predicated region
      $region25: #{tpu_custom_call.1} parent=5 // pred_check
        _
      $region26: #{tpu_custom_call.1} parent=5 // pred_check_branch
        %175 = sbr.rel (%p172) target = $region28
      $region27: #{tpu_custom_call.1} parent=5 // pred_region
        %s176 = ssub.s32 %s17, 1
        %s177 = sand.u32 %s44, 1
        %s178 = scalar_lea.sflag [#allocation3], %s177
        %s179 = sand.u32 %s44, 1
        %s180 = smul.addr %s179, 32
        %s181 = scalar_lea.vmem [#allocation2], %s180
        // Predicated region
        $region29: #{tpu_custom_call.1} parent=27 // pred_check
          %p182 = pneg %p57
        $region30: #{tpu_custom_call.1} parent=27 // pred_check_branch
          %184 = sbr.rel (%p182) target = $region32
        $region31: #{tpu_custom_call.1} parent=27 // pred_region
          %185 = dma.done %s178, 512
        $region32: #{tpu_custom_call.1} parent=27 // pred_fallthru
          _
        %s186 = sand.u32 %s72, 1
        %s187 = scalar_lea.sflag [#allocation6], %s186
        %s188 = sand.u32 %s72, 1
        %s189 = smul.addr %s188, 32
        %s190 = scalar_lea.vmem [#allocation5], %s189
        // Predicated region
        $region33: #{tpu_custom_call.1} parent=27 // pred_check
          %p191 = pneg %p85
        $region34: #{tpu_custom_call.1} parent=27 // pred_check_branch
          %193 = sbr.rel (%p191) target = $region36
        $region35: #{tpu_custom_call.1} parent=27 // pred_region
          %194 = dma.done %s187, 512
        $region36: #{tpu_custom_call.1} parent=27 // pred_fallthru
          _
        %s195 = sand.u32 %s44, 1
        %s196 = scalar_lea.sflag [#allocation3], %s195
        %s197 = sand.u32 %s44, 1
        %s198 = smul.addr %s197, 32
        %s199 = scalar_lea.vmem [#allocation2], %s198
        %p200 = pneg %p57
        %p201 = pneg %p54
        %s202 = sand.u32 %s72, 1
        %s203 = scalar_lea.sflag [#allocation6], %s202
        %s204 = sand.u32 %s72, 1
        %s205 = smul.addr %s204, 32
        %s206 = scalar_lea.vmem [#allocation5], %s205
        %p207 = pneg %p85
        %p208 = pneg %p82
        %p209 = pneg %p111
        %p210 = pneg %p108
        %s211 = sand.u32 %s98, 1
        %s212 = scalar_lea.sflag [#allocation4], %s211
        %s213 = sand.u32 %s98, 1
        %s214 = smul.addr %s213, 32
        %s215 = scalar_lea.vmem [#allocation7], %s214
        %s216 = sadd.s32 %s26, %s27
        %s217 = sadd.s32 %s26, %s27
        %p218 = scmp.eq.s32.totalorder %s27, 0
        // Predicated region
        $region37: #{tpu_custom_call.1} parent=27 // pred_check
          %p219 = pneg %p218
        $region38: #{tpu_custom_call.1} parent=27 // pred_check_branch
          %221 = sbr.rel (%p219) target = $region40
        $region39: #{tpu_custom_call.1} parent=27 // pred_region
          %222 = vst [vmem:[%s215] sm:$0xff] 0.0
          %223 = vst [vmem:[%s215 + $0x8] sm:$0xff] 0.0
          %224 = vst [vmem:[%s215 + $0x10] sm:$0xff] 0.0
          %225 = vst [vmem:[%s215 + $0x18] sm:$0xff] 0.0
        $region40: #{tpu_custom_call.1} parent=27 // pred_fallthru
          _
        %v226 = vld [vmem:[%s181] sm:$0xff]
        %v227 = vld [vmem:[%s181 + $0x8] sm:$0xff]
        %v228 = vld [vmem:[%s181 + $0x10] sm:$0xff]
        %v229 = vld [vmem:[%s181 + $0x18] sm:$0xff]
        %v230 = vld [vmem:[%s190] sm:$0xff]
        %v231 = vld [vmem:[%s190 + $0x8] sm:$0xff]
        %v232 = vld [vmem:[%s190 + $0x10] sm:$0xff]
        %v233 = vld [vmem:[%s190 + $0x18] sm:$0xff]
        %v234 = vsub.f32 %v226, %v230
        %v235 = vsub.f32 %v227, %v231
        %v236 = vsub.f32 %v228, %v232
        %v237 = vsub.f32 %v229, %v233
        %v238 = vand.u32 2147483647, %v234
        %v239 = vand.u32 2147483647, %v235
        %v240 = vand.u32 2147483647, %v236
        %v241 = vand.u32 2147483647, %v237
        %v242 = vld [vmem:[%s215] sm:$0xff]
        %v243 = vld [vmem:[%s215 + $0x8] sm:$0xff]
        %v244 = vld [vmem:[%s215 + $0x10] sm:$0xff]
        %v245 = vld [vmem:[%s215 + $0x18] sm:$0xff]
        %v246 = vadd.f32 %v238, 0.0
        %v247 = vadd.f32 %v239, 0.0
        %v248 = vadd.f32 %v240, 0.0
        %v249 = vadd.f32 %v241, 0.0
        %v250 = vadd.f32 %v242, %v246
        %v251 = vadd.f32 %v243, %v247
        %v252 = vadd.f32 %v244, %v248
        %v253 = vadd.f32 %v245, %v249
        %254 = vst [vmem:[%s215] sm:$0xff] %v250
        %255 = vst [vmem:[%s215 + $0x8] sm:$0xff] %v251
        %256 = vst [vmem:[%s215 + $0x10] sm:$0xff] %v252
        %257 = vst [vmem:[%s215 + $0x18] sm:$0xff] %v253
        %s258 = sand.u32 %s98, 1
        %s259 = scalar_lea.sflag [#allocation4], %s258
        %s260 = sand.u32 %s98, 1
        %s261 = smul.addr %s260, 32
        %s262 = scalar_lea.vmem [#allocation7], %s261
        // Predicated region
        $region41: #{tpu_custom_call.1} parent=27 // pred_check
          %p263 = pneg %p108
        $region42: #{tpu_custom_call.1} parent=27 // pred_check_branch
          %265 = sbr.rel (%p263) target = $region44
        $region43: #{tpu_custom_call.1} parent=27 // pred_region
          %s267 = ssub.s32 512, 512
          %268 = vsyncadd %s259, %s267
          %s269 = smul.addr %s26, 4
          %s270 = smul.addr %s269, 128
          %s271 = scalar_lea.hbm %s2, %s270
          %s273 = sshll.u32 %s262, 4
          %s274 = int_to_ptr.vmem [resolvable:$true] %s273
          %276 = dma.vmem_to_hbm [thread:$0]  %s274, 512, %s271, %s259
        $region44: #{tpu_custom_call.1} parent=27 // pred_fallthru
          _
      $region28: #{tpu_custom_call.1} parent=5 // pred_fallthru
        _
      %p277 = scmp.le.s32.totalorder 2, %s17
      // Predicated region
      $region45: #{tpu_custom_call.1} parent=5 // pred_check
        %p278 = pneg %p277
      $region46: #{tpu_custom_call.1} parent=5 // pred_check_branch
        %280 = sbr.rel (%p278) target = $region48
      $region47: #{tpu_custom_call.1} parent=5 // pred_region
        %s281 = ssub.s32 %s17, 2
        // Predicated region
        $region49: #{tpu_custom_call.1} parent=47 // pred_check
          %p282 = pneg %p114
        $region50: #{tpu_custom_call.1} parent=47 // pred_check_branch
          %284 = sbr.rel (%p282) target = $region52
        $region51: #{tpu_custom_call.1} parent=47 // pred_region
          %s285 = sand.u32 %s99, 1
          %s286 = scalar_lea.sflag [#allocation4], %s285
          %s287 = sand.u32 %s99, 1
          %s288 = smul.addr %s287, 32
          %s289 = scalar_lea.vmem [#allocation7], %s288
          %290 = dma.done %s286, 512
        $region52: #{tpu_custom_call.1} parent=47 // pred_fallthru
          _
      $region48: #{tpu_custom_call.1} parent=5 // pred_fallthru
        _
    $region6: #{tpu_custom_call.1} parent=1 // loop_footer
      %s21 = sadd.s32 1, %s17
    $region7: #{tpu_custom_call.1} parent=1 // loop_footer_branch
      %16 = sbr.rel target = $region3
    $region8: #{tpu_custom_call.1} parent=1 // loop_exit
      _
    %291 = vsyncpa [#allocation3], 1
    %s292 = scalar_lea.sflag [#allocation3], 1
    %293 = vsyncpa %s292, 1
    %294 = vsyncpa [#allocation6], 1
    %s295 = scalar_lea.sflag [#allocation6], 1
    %296 = vsyncpa %s295, 1
    %297 = vsyncpa [#allocation4], 1
    %s298 = scalar_lea.sflag [#allocation4], 1
    %299 = vsyncpa %s298, 1

</llo_original>
